<compile_context>
chip_gen: v5e
topology: v5e:2x2
jax: 0.10.0
libtpu: 0.0.40
codegen_flags: <defaults>
</compile_context>

<pallas_src>
import jax
import jax.numpy as jnp
from jax.experimental import pallas as pl
from jax.experimental.pallas import tpu as pltpu


_LANE = 128       # lane width: output last dim padded to a multiple of this
_SUBLANE = 8      # sublane quantum: batch tile must be a multiple of this
_MAX_TILE_B = 256  # MXU-native height on v6e/v7x; fits VMEM comfortably


def _round_up(x, m):
    return ((x + m - 1) // m) * m


# ----------------------------- Pallas kernel -------------------------------

def _linear_relu_kernel(x_ref, w_ref, b_ref, o_ref):
    # Fused Linear + ReLU on one (TILE_B, F) x (F, H_pad) tile:
    #   o = max(x @ W + b, 0)
    y = jnp.dot(x_ref[...], w_ref[...], preferred_element_type=jnp.float32)
    y = y + b_ref[...]                       # (TILE_B, H_pad) + (1, H_pad)
    o_ref[...] = jnp.maximum(y, 0.0).astype(o_ref.dtype)


# ------------------------------ JAX wrapper ---------------------------------

def _mlp_forward(feat, w_pad, b_pad, out_dim, *, max_tile_b=_MAX_TILE_B):
    """feat: (B, F) f32; w_pad: (F, H_pad); b_pad: (1, H_pad); returns (B, out_dim)."""
    B, F = feat.shape
    F_w, H_pad = w_pad.shape
    assert F == F_w, (F, F_w)
    assert H_pad % _LANE == 0

    # Batch tile: biggest multiple of 8 up to max_tile_b; pad B so the grid
    # divides evenly (padded rows are cheap zeros, sliced off below).
    if B <= max_tile_b:
        tile_b = _round_up(B, _SUBLANE)
    else:
        tile_b = max_tile_b
    B_pad = _round_up(B, tile_b)
    x = feat if B_pad == B else jnp.pad(feat, ((0, B_pad - B), (0, 0)))

    grid = (B_pad // tile_b,)
    itemsize = jnp.dtype(feat.dtype).itemsize
    cost = pl.CostEstimate(
        flops=2 * B_pad * F * H_pad,
        transcendentals=0,
        bytes_accessed=(x.size + w_pad.size + b_pad.size + B_pad * H_pad) * itemsize,
    )

    out = pl.pallas_call(
        _linear_relu_kernel,
        out_shape=jax.ShapeDtypeStruct((B_pad, H_pad), feat.dtype),
        grid=grid,
        in_specs=[
            pl.BlockSpec((tile_b, F), lambda i: (i, 0)),   # streamed over batch
            pl.BlockSpec((F, H_pad), lambda i: (0, 0)),    # W resident in VMEM
            pl.BlockSpec((1, H_pad), lambda i: (0, 0)),    # bias resident in VMEM
        ],
        out_specs=pl.BlockSpec((tile_b, H_pad), lambda i: (i, 0)),
        compiler_params=pltpu.CompilerParams(
            dimension_semantics=("parallel",),             # megacore on v7x
        ),
        cost_estimate=cost,
    )(x, w_pad, b_pad)

    return out[:B, :out_dim]


class EncoderNetwork:
    """JAX/Pallas re-implementation of rls EncoderNetwork.forward."""

    def __init__(self, feat_dim=64, h_dim=64, network_type="identity", key=None):
        self.network_type = network_type
        if network_type == "identity":
            self.h_dim = feat_dim
            self.params = {}
        else:
            # Learned encoder: Linear(feat_dim, h_dim) + ReLU.
            self.h_dim = h_dim
            if key is None:
                key = jax.random.PRNGKey(0)
            kw, kb = jax.random.split(key)
            bound = 1.0 / (feat_dim ** 0.5)     # PyTorch nn.Linear init range
            w = jax.random.uniform(kw, (feat_dim, h_dim), jnp.float32, -bound, bound)
            b = jax.random.uniform(kb, (h_dim,), jnp.float32, -bound, bound)
            self.params = {"w": w, "b": b}
            # Pad the output (lane) dim to a multiple of 128 once, at init:
            # lane-dense stores + full-width MXU result tiles inside the kernel.
            h_pad = _round_up(h_dim, _LANE)
            if h_pad != h_dim:
                self._w_pad = jnp.pad(w, ((0, 0), (0, h_pad - h_dim)))
                self._b_pad = jnp.pad(b, (0, h_pad - h_dim)).reshape(1, h_pad)
            else:
                self._w_pad = w
                self._b_pad = b.reshape(1, h_pad)

    def __call__(self, feat):
        if self.network_type == "identity":
            # Identity encoder is a pass-through: no kernel launch, no DMA.
            return feat
        return _mlp_forward(feat, self._w_pad, self._b_pad, self.h_dim)


# ---------------------------------- main ------------------------------------

if __name__ == "__main__":
    key = jax.random.PRNGKey(0)
    k_feat, k_feat2, k_params = jax.random.split(key, 3)

    batch, feat_dim, h_dim = 8, 64, 32
    feat = jax.random.normal(k_feat, (batch, feat_dim), dtype=jnp.float32)

    # Default module config: network_type='identity' -> pure pass-through.
    enc_id = EncoderNetwork(feat_dim=feat_dim, h_dim=h_dim, network_type="identity")
    out_id = jax.block_until_ready(enc_id(feat))
    assert out_id.shape == (batch, feat_dim)
    assert jnp.array_equal(out_id, feat), "identity encoder mismatch"

    # Learned encoder path (Pallas Linear + ReLU), small batch -> single tile.
    enc_mlp = EncoderNetwork(feat_dim=feat_dim, h_dim=h_dim,
                             network_type="mlp", key=k_params)
    out_mlp = jax.block_until_ready(enc_mlp(feat))
    ref = jnp.maximum(feat @ enc_mlp.params["w"] + enc_mlp.params["b"], 0.0)
    assert out_mlp.shape == (batch, h_dim)
    assert jnp.allclose(out_mlp, ref, atol=1e-5, rtol=1e-5), "mlp encoder mismatch"

    # Larger (still small) batch that exercises the batch-tiled grid (>1 step)
    # and the boundary padding path.
    batch2 = 260
    feat2 = jax.random.normal(k_feat2, (batch2, feat_dim), dtype=jnp.float32)
    out2 = jax.block_until_ready(enc_mlp(feat2))
    ref2 = jnp.maximum(feat2 @ enc_mlp.params["w"] + enc_mlp.params["b"], 0.0)
    assert out2.shape == (batch2, h_dim)
    assert jnp.allclose(out2, ref2, atol=1e-5, rtol=1e-5), "tiled mlp encoder mismatch"

    print("KERNEL_OK")
</pallas_src>

<mosaic_0001>
module attributes {stable_mosaic.version = 11 : i64} {
  func.func @_linear_relu_kernel(%arg0: i32, %arg1: memref<8x64xf32, #tpu.memory_space<vmem>>, %arg2: memref<64x128xf32, #tpu.memory_space<vmem>>, %arg3: memref<1x128xf32, #tpu.memory_space<vmem>>, %arg4: memref<8x128xf32, #tpu.memory_space<vmem>>) attributes {dimension_semantics = [#tpu.dimension_semantics<parallel>], iteration_bounds = array<i64: 1>, scalar_prefetch = 0 : i64, scratch_operands = 0 : i64, tpu.core_type = #tpu.core_type<tc>, window_params = [{transform_indices = @transform_0, window_bounds = array<i64: 8, 64>}, {pipeline_mode = #tpu.pipeline_mode<synchronous>, transform_indices = @transform_1, window_bounds = array<i64: 64, 128>}, {pipeline_mode = #tpu.pipeline_mode<synchronous>, transform_indices = @transform_2, window_bounds = array<i64: 1, 128>}, {transform_indices = @transform_3, window_bounds = array<i64: 8, 128>}]} {
    %c0 = arith.constant 0 : index
    %c0_0 = arith.constant 0 : index
    %0 = vector.load %arg1[%c0, %c0_0] : memref<8x64xf32, #tpu.memory_space<vmem>>, vector<8x64xf32>
    %c0_1 = arith.constant 0 : index
    %c0_2 = arith.constant 0 : index
    %1 = vector.load %arg2[%c0_1, %c0_2] : memref<64x128xf32, #tpu.memory_space<vmem>>, vector<64x128xf32>
    %cst = arith.constant dense<0.000000e+00> : vector<8x128xf32>
    %2 = tpu.matmul %0, %1, %cst {dimension_numbers = #tpu.dot_dimension_numbers<[1], [0], [0], [1], [0, 0, 1, 1], [], []>} : vector<8x64xf32>, vector<64x128xf32>, vector<8x128xf32> -> vector<8x128xf32>
    %c0_3 = arith.constant 0 : index
    %c0_4 = arith.constant 0 : index
    %3 = vector.load %arg3[%c0_3, %c0_4] : memref<1x128xf32, #tpu.memory_space<vmem>>, vector<1x128xf32>
    %4 = vector.broadcast %3 : vector<1x128xf32> to vector<8x128xf32>
    %5 = arith.addf %2, %4 : vector<8x128xf32>
    %cst_5 = arith.constant 0.000000e+00 : f32
    %6 = vector.broadcast %cst_5 : f32 to vector<8x128xf32>
    %7 = arith.maximumf %5, %6 : vector<8x128xf32>
    %c0_6 = arith.constant 0 : index
    %c0_7 = arith.constant 0 : index
    %8 = vector.load %arg4[%c0_6, %c0_7] : memref<8x128xf32, #tpu.memory_space<vmem>>, vector<8x128xf32>
    tpu.vector_store %arg4[%c0_6, %c0_7], %7 {strides = array<i32>} : memref<8x128xf32, #tpu.memory_space<vmem>>, vector<8x128xf32>,
    return
  }
  func.func @transform_0(%arg0: i32) -> (i32, i32) {
    %c0_i32 = arith.constant 0 : i32
    %c0_i32_0 = arith.constant 0 : i32
    return %arg0, %c0_i32 : i32, i32
  }
  func.func @transform_1(%arg0: i32) -> (i32, i32) {
    %c0_i32 = arith.constant 0 : i32
    %c0_i32_0 = arith.constant 0 : i32
    %c0_i32_1 = arith.constant 0 : i32
    return %c0_i32, %c0_i32_0 : i32, i32
  }
  func.func @transform_2(%arg0: i32) -> (i32, i32) {
    %c0_i32 = arith.constant 0 : i32
    %c0_i32_0 = arith.constant 0 : i32
    %c0_i32_1 = arith.constant 0 : i32
    return %c0_i32, %c0_i32_0 : i32, i32
  }
  func.func @transform_3(%arg0: i32) -> (i32, i32) {
    %c0_i32 = arith.constant 0 : i32
    %c0_i32_0 = arith.constant 0 : i32
    return %arg0, %c0_i32 : i32, i32
  }
}

</mosaic_0001>

<llo_original>
// kernel: tpu_custom_call.1
$region0: #{tpu_custom_call.1}
  #allocation0 [shape = 'u32[]', space=smem, size = 0x4, offset = 0x4, fixed_abs, tag = 'smem constant byte address 0x4 - core index']
  #allocation1 [shape = 'u32[72,128]{1,0:T(1,128)}', space=vmem, size = 0x9000, scoped, tag = 'internal scratch']
  %s0 = inlined_call_operand.hbm [shape: f32[8,64], index: 0, kind: input, shape index: {}]
  %s1 = inlined_call_operand.hbm [shape: f32[64,128], index: 1, kind: input, shape index: {}]
  %s2 = inlined_call_operand.vmem [shape: f32[1,128], index: 2, kind: input, shape index: {}]
  %s3 = inlined_call_operand.hbm [shape: f32[8,128], index: 3, kind: output, shape index: {}]
  %s4 = sld [smem:[#allocation0]]
  $region30: #{tpu_custom_call.1} parent=0
    _
  %s6 = ssub.s32 1, %s4
  %s7 = scalar_select 0, %s6, %s4
  $region1: #{tpu_custom_call.1} parent=0
    #allocation2 [shape = 'u8[4096]{0}', space=vmem, size = 0x1000, scoped, tag = 'input window, operand 0, single buffered']
    #allocation3 [shape = 's32[1]{0}', space=sflag, size = 0x4, scoped, tag = 'scoped memory for tpu_custom_call.1']
    #allocation4 [shape = 's32[1]{0}', space=sflag, size = 0x4, scoped, tag = 'scoped memory for tpu_custom_call.1']
    #allocation5 [shape = 'u8[32768]{0}', space=vmem, size = 0x8000, scoped, tag = 'input window, operand 1, single buffered']
    #allocation6 [shape = 's32[1]{0}', space=sflag, size = 0x4, scoped, tag = 'scoped memory for tpu_custom_call.1']
    #allocation7 [shape = 'u8[4096]{0}', space=vmem, size = 0x1000, scoped, tag = 'output window, operand 0, single buffered']
    %8 = vsyncpa [#allocation3], 0
    %9 = vsyncpa [#allocation6], 0
    %10 = vsyncpa [#allocation4], 0
    // Predicated region
    $region2: #{tpu_custom_call.1} parent=1 // pred_check
      _
    $region3: #{tpu_custom_call.1} parent=1 // pred_check_branch
      %12 = sbr.rel (0) target = $region5
    $region4: #{tpu_custom_call.1} parent=1 // pred_region
      %14 = vsyncadd [#allocation3], 0
      %s16 = sshll.u32 %s0, 4
      %s17 = int_to_ptr.hbm [resolvable:$true] %s16
      %s18 = sshll.u32 [#allocation2], 4
      %s19 = int_to_ptr.vmem [resolvable:$true] %s18
      %21 = dma.hbm_to_vmem [thread:$0]  %s17, 128, %s19, [#allocation3]
    $region5: #{tpu_custom_call.1} parent=1 // pred_fallthru
      _
    // Predicated region
    $region6: #{tpu_custom_call.1} parent=1 // pred_check
      _
    $region7: #{tpu_custom_call.1} parent=1 // pred_check_branch
      %23 = sbr.rel (0) target = $region9
    $region8: #{tpu_custom_call.1} parent=1 // pred_region
      %25 = vsyncadd [#allocation6], 0
      %s26 = sshll.u32 %s1, 4
      %s27 = int_to_ptr.hbm [resolvable:$true] %s26
      %s28 = sshll.u32 [#allocation5], 4
      %s29 = int_to_ptr.vmem [resolvable:$true] %s28
      %34 = dma.hbm_to_vmem [thread:$0]  %s27, 1024, %s29, [#allocation6], 128, 128, 8
    $region9: #{tpu_custom_call.1} parent=1 // pred_fallthru
      _
    // Predicated region
    $region10: #{tpu_custom_call.1} parent=1 // pred_check
      _
    $region11: #{tpu_custom_call.1} parent=1 // pred_check_branch
      %36 = sbr.rel (0) target = $region13
    $region12: #{tpu_custom_call.1} parent=1 // pred_region
      _
    $region13: #{tpu_custom_call.1} parent=1 // pred_fallthru
      _
    // Predicated region
    $region14: #{tpu_custom_call.1} parent=1 // pred_check
      _
    $region15: #{tpu_custom_call.1} parent=1 // pred_check_branch
      %38 = sbr.rel (0) target = $region17
    $region16: #{tpu_custom_call.1} parent=1 // pred_region
      %40 = dma.done [#allocation3], 128
    $region17: #{tpu_custom_call.1} parent=1 // pred_fallthru
      _
    // Predicated region
    $region18: #{tpu_custom_call.1} parent=1 // pred_check
      _
    $region19: #{tpu_custom_call.1} parent=1 // pred_check_branch
      %42 = sbr.rel (0) target = $region21
    $region20: #{tpu_custom_call.1} parent=1 // pred_region
      %44 = dma.done [#allocation6], 1024
    $region21: #{tpu_custom_call.1} parent=1 // pred_fallthru
      _
    %v45 = vld [vmem:[#allocation2] sm:$0xff]
    %v46 = vld [vmem:[#allocation5] sm:$0xff]
    %v47 = vld [vmem:[#allocation5 + $0x8] sm:$0xff]
    %v48 = vld [vmem:[#allocation5 + $0x10] sm:$0xff]
    %v49 = vld [vmem:[#allocation5 + $0x18] sm:$0xff]
    %v50 = vld [vmem:[#allocation5 + $0x20] sm:$0xff]
    %v51 = vld [vmem:[#allocation5 + $0x28] sm:$0xff]
    %v52 = vld [vmem:[#allocation5 + $0x30] sm:$0xff]
    %v53 = vld [vmem:[#allocation5 + $0x38] sm:$0xff]
    %v54 = vld [vmem:[%s2] sm:$0x1]
    %v56 = vperm.slane %v54, 0
    %vm58 = vcmask 523264
    %v60 = vsel %vm58, %v45, 0
    %62 = vmatpush.msra.mxu0 0.0
    %63 = vmatpush.msra.mxu0 0.0
    %64 = vmatpush.msra.mxu0 0.0
    %65 = vmatpush.msra.mxu0 0.0
    %66 = vmatpush.msra.mxu0 0.0
    %67 = vmatpush.msra.mxu0 0.0
    %68 = vmatpush.msra.mxu0 0.0
    %69 = vmatpush.msra.mxu0 0.0
    %70 = vmatpush.msra.mxu0 %v53
    %71 = vmatpush.msra.mxu0 %v52
    %72 = vmatpush.msra.mxu0 %v51
    %73 = vmatpush.msra.mxu0 %v50
    %74 = vmatpush.msra.mxu0 %v49
    %75 = vmatpush.msra.mxu0 %v48
    %76 = vmatpush.msra.mxu0 %v47
    %77 = vmatpush.msra.mxu0 %v46
    %78 = vmatmul.f32.gmra.mxu0 %v60
    %v79 = vpop.f32.mrf.mxu0
    %v80 = vadd.f32 %v56, %v79
    %81 = vdwg.mxu0
    %v82 = vmax.f32 %v80, 0.0
    %83 = vst [vmem:[#allocation7] sm:$0xff] %v82
    // Predicated region
    $region22: #{tpu_custom_call.1} parent=1 // pred_check
      _
    $region23: #{tpu_custom_call.1} parent=1 // pred_check_branch
      %85 = sbr.rel (0) target = $region25
    $region24: #{tpu_custom_call.1} parent=1 // pred_region
      %87 = vsyncadd [#allocation4], 0
      %s89 = sshll.u32 [#allocation7], 4
      %s90 = int_to_ptr.vmem [resolvable:$true] %s89
      %s91 = sshll.u32 %s3, 4
      %s92 = int_to_ptr.hbm [resolvable:$true] %s91
      %94 = dma.vmem_to_hbm [thread:$0]  %s90, 128, %s92, [#allocation4]
    $region25: #{tpu_custom_call.1} parent=1 // pred_fallthru
      _
    // Predicated region
    $region26: #{tpu_custom_call.1} parent=1 // pred_check
      _
    $region27: #{tpu_custom_call.1} parent=1 // pred_check_branch
      %96 = sbr.rel (0) target = $region29
    $region28: #{tpu_custom_call.1} parent=1 // pred_region
      %98 = dma.done [#allocation4], 128
    $region29: #{tpu_custom_call.1} parent=1 // pred_fallthru
      _
    %99 = vsyncpa [#allocation3], 1
    %100 = vsyncpa [#allocation6], 1
    %101 = vsyncpa [#allocation4], 1

</llo_original>
